<compile_context>
chip_gen: v5e
topology: v5e:2x2
jax: 0.10.0
libtpu: 0.0.40
codegen_flags: <defaults>
</compile_context>

<pallas_src>
import functools

import jax
import jax.numpy as jnp
from jax.experimental import pallas as pl
from jax.experimental.pallas import tpu as pltpu


def _round_up(n, m):
    return ((n + m - 1) // m) * m


def _act(y, activation):
    if activation == "relu":
        return jnp.maximum(y, 0.0)
    if activation == "sigmoid":
        return jax.nn.sigmoid(y)
    if activation == "tanh":
        return jnp.tanh(y)
    if activation == "leaky_relu":
        return jnp.where(y > 0.0, y, 0.01 * y)  # PyTorch default slope
    raise ValueError(f"unknown activation {activation!r}")


def _cvae_fwd_kernel(*refs, n_enc, n_dec, activation, latent_pad):
    """Fused CVAE forward on one batch tile; weights are whole-array VMEM refs."""
    it = iter(refs)
    x = next(it)[...]
    c = next(it)[...]
    eps = next(it)[...]

    # --- encoder first layer: cat([x, c]) @ W  ==  x@Wx + c@Wc ---
    wx = next(it)[...]
    wc = next(it)[...]
    b0 = next(it)[...]
    h = (jnp.dot(x, wx, preferred_element_type=jnp.float32)
         + jnp.dot(c, wc, preferred_element_type=jnp.float32) + b0)
    h = _act(h, activation)
    for _ in range(n_enc - 1):
        w = next(it)[...]
        b = next(it)[...]
        h = _act(jnp.dot(h, w, preferred_element_type=jnp.float32) + b, activation)

    # --- fused fc_mu || fc_logvar: single (H, 2*latent_pad) matmul ---
    w_ml = next(it)[...]
    b_ml = next(it)[...]
    ml = jnp.dot(h, w_ml, preferred_element_type=jnp.float32) + b_ml
    mu = ml[:, :latent_pad]
    logvar = ml[:, latent_pad:]

    # --- reparameterization (exp -> EUP, mul-add -> VPU, free beside the MXU) ---
    z = mu + eps * jnp.exp(0.5 * logvar)

    # --- decoder first layer: cat([z, c]) @ W  ==  z@Wz + c@Wc ---
    wz = next(it)[...]
    wc2 = next(it)[...]
    bd0 = next(it)[...]
    h = (jnp.dot(z, wz, preferred_element_type=jnp.float32)
         + jnp.dot(c, wc2, preferred_element_type=jnp.float32) + bd0)
    h = _act(h, activation)
    for _ in range(n_dec - 1):
        w = next(it)[...]
        b = next(it)[...]
        h = _act(jnp.dot(h, w, preferred_element_type=jnp.float32) + b, activation)

    # --- output layer + sigmoid ---
    w_o = next(it)[...]
    b_o = next(it)[...]
    recon = jax.nn.sigmoid(jnp.dot(h, w_o, preferred_element_type=jnp.float32) + b_o)

    recon_ref = next(it)
    mu_ref = next(it)
    logvar_ref = next(it)
    recon_ref[...] = recon.astype(recon_ref.dtype)
    mu_ref[...] = mu.astype(mu_ref.dtype)
    logvar_ref[...] = logvar.astype(logvar_ref.dtype)


def cvae_forward(params, x, c, eps, *, n_enc, n_dec, activation,
                 input_dim, cond_dim, latent_dim):
    """Pad inputs, run the fused batch-tiled Pallas kernel, slice padding off."""
    B = x.shape[0]
    dtype = x.dtype
    b_pad = max(_round_up(B, 8), 8)           # full f32 sublanes
    # Batch tile: whole batch for small B; 128-row tiles for large B so the
    # grid axis can be split across TensorCores and software-pipelined.
    if b_pad <= 128:
        tb = b_pad
    else:
        tb = 128
        b_pad = _round_up(b_pad, tb)
    in_pad = _round_up(input_dim, 128)        # lane-dense feature dims
    cond_pad = _round_up(cond_dim, 128)
    lat_pad = _round_up(latent_dim, 128)

    xp = jnp.zeros((b_pad, in_pad), dtype).at[:B, :input_dim].set(x)
    cp = jnp.zeros((b_pad, cond_pad), dtype).at[:B, :cond_dim].set(c)
    ep = jnp.zeros((b_pad, lat_pad), dtype).at[:B, :latent_dim].set(eps)

    inputs = (xp, cp, ep) + tuple(params)

    def batch_spec(ncols):
        return pl.BlockSpec((tb, ncols), lambda i: (i, 0))

    def full_spec(arr):
        # Whole-array block, constant index => loaded once, reused per tile.
        return pl.BlockSpec(arr.shape, lambda i: (0, 0))

    in_specs = [batch_spec(in_pad), batch_spec(cond_pad), batch_spec(lat_pad)]
    in_specs += [full_spec(p) for p in params]

    kernel = functools.partial(
        _cvae_fwd_kernel, n_enc=n_enc, n_dec=n_dec,
        activation=activation, latent_pad=lat_pad)

    recon_p, mu_p, logvar_p = pl.pallas_call(
        kernel,
        grid=(b_pad // tb,),
        out_shape=(
            jax.ShapeDtypeStruct((b_pad, in_pad), dtype),
            jax.ShapeDtypeStruct((b_pad, lat_pad), dtype),
            jax.ShapeDtypeStruct((b_pad, lat_pad), dtype),
        ),
        in_specs=in_specs,
        out_specs=(batch_spec(in_pad), batch_spec(lat_pad), batch_spec(lat_pad)),
        compiler_params=pltpu.CompilerParams(
            dimension_semantics=("parallel",)),
    )(*inputs)

    return (recon_p[:B, :input_dim],
            mu_p[:B, :latent_dim],
            logvar_p[:B, :latent_dim])


class CVAE:
    """Parameters + fused Pallas forward mirroring the PyTorch CVAE."""

    def __init__(self, input_dim, encoder_layers, decoder_layers, latent_dim,
                 cond_dim, activation, key, dtype=jnp.float32):
        assert activation in ("relu", "sigmoid", "tanh", "leaky_relu")
        self.activation = activation
        self.input_dim = input_dim
        self.latent_dim = latent_dim
        self.cond_dim = cond_dim
        self.dtype = dtype

        enc_dims = [input_dim + cond_dim] + list(encoder_layers)
        dec_dims = [latent_dim + cond_dim] + list(decoder_layers)
        self.n_enc = len(enc_dims) - 1
        self.n_dec = len(dec_dims) - 1

        def P(d):
            return _round_up(d, 128)

        keys = iter(jax.random.split(key, self.n_enc + self.n_dec + 3))

        def raw_linear(k, fan_in, fan_out):
            # PyTorch nn.Linear init: U(-1/sqrt(fan_in), 1/sqrt(fan_in))
            kw, kb = jax.random.split(k)
            bound = 1.0 / (fan_in ** 0.5)
            w = jax.random.uniform(kw, (fan_in, fan_out), dtype, -bound, bound)
            b = jax.random.uniform(kb, (1, fan_out), dtype, -bound, bound)
            return w, b

        def pad_wb(w, b, in_pad, out_pad):
            fi, fo = w.shape
            wp = jnp.zeros((in_pad, out_pad), dtype).at[:fi, :fo].set(w)
            bp = jnp.zeros((1, out_pad), dtype).at[:, :fo].set(b)
            return wp, bp

        params = []

        # encoder first layer, split into x-part / c-part (removes the concat)
        w0, b0 = raw_linear(next(keys), enc_dims[0], enc_dims[1])
        raw_enc = [(w0, b0)]
        wx = jnp.zeros((P(input_dim), P(enc_dims[1])), dtype).at[
            :input_dim, :enc_dims[1]].set(w0[:input_dim])
        wc = jnp.zeros((P(cond_dim), P(enc_dims[1])), dtype).at[
            :cond_dim, :enc_dims[1]].set(w0[input_dim:])
        bp = jnp.zeros((1, P(enc_dims[1])), dtype).at[:, :enc_dims[1]].set(b0)
        params += [wx, wc, bp]
        for i in range(1, self.n_enc):
            w, b = raw_linear(next(keys), enc_dims[i], enc_dims[i + 1])
            raw_enc.append((w, b))
            params += list(pad_wb(w, b, P(enc_dims[i]), P(enc_dims[i + 1])))

        # fused fc_mu || fc_logvar: one (H_pad, 2*L_pad) weight
        H, Hp, Lp = enc_dims[-1], P(enc_dims[-1]), P(latent_dim)
        w_mu, b_mu = raw_linear(next(keys), H, latent_dim)
        w_lv, b_lv = raw_linear(next(keys), H, latent_dim)
        w_ml = (jnp.zeros((Hp, 2 * Lp), dtype)
                .at[:H, :latent_dim].set(w_mu)
                .at[:H, Lp:Lp + latent_dim].set(w_lv))
        b_ml = (jnp.zeros((1, 2 * Lp), dtype)
                .at[:, :latent_dim].set(b_mu)
                .at[:, Lp:Lp + latent_dim].set(b_lv))
        params += [w_ml, b_ml]

        # decoder first layer, split into z-part / c-part
        w0, b0 = raw_linear(next(keys), dec_dims[0], dec_dims[1])
        raw_dec = [(w0, b0)]
        wz = jnp.zeros((Lp, P(dec_dims[1])), dtype).at[
            :latent_dim, :dec_dims[1]].set(w0[:latent_dim])
        wc2 = jnp.zeros((P(cond_dim), P(dec_dims[1])), dtype).at[
            :cond_dim, :dec_dims[1]].set(w0[latent_dim:])
        bp = jnp.zeros((1, P(dec_dims[1])), dtype).at[:, :dec_dims[1]].set(b0)
        params += [wz, wc2, bp]
        for i in range(1, self.n_dec):
            w, b = raw_linear(next(keys), dec_dims[i], dec_dims[i + 1])
            raw_dec.append((w, b))
            params += list(pad_wb(w, b, P(dec_dims[i]), P(dec_dims[i + 1])))

        # fc_output
        w_o, b_o = raw_linear(next(keys), dec_dims[-1], input_dim)
        params += list(pad_wb(w_o, b_o, P(dec_dims[-1]), P(input_dim)))

        self.params = tuple(params)

        # unpadded copies only for the pure-JAX correctness reference
        self._raw_enc = raw_enc
        self._raw_mu = (w_mu, b_mu)
        self._raw_lv = (w_lv, b_lv)
        self._raw_dec = raw_dec
        self._raw_out = (w_o, b_o)

        self._fwd = jax.jit(functools.partial(
            cvae_forward, n_enc=self.n_enc, n_dec=self.n_dec,
            activation=activation, input_dim=input_dim,
            cond_dim=cond_dim, latent_dim=latent_dim))

    def forward(self, x, c, eps_key):
        # torch.randn_like equivalent: eps drawn with jax.random outside the
        # kernel and passed in (won't bit-match a torch run).
        eps = jax.random.normal(eps_key, (x.shape[0], self.latent_dim), self.dtype)
        return self._fwd(self.params, x, c, eps)

    def reference_forward(self, x, c, eps_key):
        """Pure-JAX (non-Pallas) forward, used only to validate the kernel."""
        eps = jax.random.normal(eps_key, (x.shape[0], self.latent_dim), self.dtype)
        h = jnp.concatenate([x, c], axis=1)
        for w, b in self._raw_enc:
            h = _act(h @ w + b, self.activation)
        mu = h @ self._raw_mu[0] + self._raw_mu[1]
        logvar = h @ self._raw_lv[0] + self._raw_lv[1]
        z = mu + eps * jnp.exp(0.5 * logvar)
        h = jnp.concatenate([z, c], axis=1)
        for w, b in self._raw_dec:
            h = _act(h @ w + b, self.activation)
        recon = jax.nn.sigmoid(h @ self._raw_out[0] + self._raw_out[1])
        return recon, mu, logvar


def _check(model, x, c, key, batch, input_dim, latent_dim):
    recon, mu, logvar = model.forward(x, c, key)
    jax.block_until_ready((recon, mu, logvar))
    assert recon.shape == (batch, input_dim)
    assert mu.shape == (batch, latent_dim)
    assert logvar.shape == (batch, latent_dim)
    assert bool(jnp.all(jnp.isfinite(recon)))
    assert bool(jnp.all((recon >= 0.0) & (recon <= 1.0)))  # sigmoid range
    r_ref, mu_r, lv_r = model.reference_forward(x, c, key)
    assert bool(jnp.allclose(recon, r_ref, rtol=1e-2, atol=1e-2))
    assert bool(jnp.allclose(mu, mu_r, rtol=1e-2, atol=1e-2))
    assert bool(jnp.allclose(logvar, lv_r, rtol=1e-2, atol=1e-2))


if __name__ == "__main__":
    key = jax.random.PRNGKey(0)
    k_params, k_x, k_c, k_eps, k_x2, k_c2, k_eps2 = jax.random.split(key, 7)

    batch = 2
    input_dim = 16
    cond_dim = 4
    latent_dim = 8
    encoder_layers = [32, 16]
    decoder_layers = [16, 32]

    model = CVAE(input_dim, encoder_layers, decoder_layers, latent_dim,
                 cond_dim, activation="relu", key=k_params)

    # Small batch (single grid step).
    x = jax.random.normal(k_x, (batch, input_dim), jnp.float32)
    c = jax.random.normal(k_c, (batch, cond_dim), jnp.float32)
    _check(model, x, c, k_eps, batch, input_dim, latent_dim)

    # Larger batch to exercise the batch-tiled grid path (grid > 1).
    big_batch = 300
    xb = jax.random.normal(k_x2, (big_batch, input_dim), jnp.float32)
    cb = jax.random.normal(k_c2, (big_batch, cond_dim), jnp.float32)
    _check(model, xb, cb, k_eps2, big_batch, input_dim, latent_dim)

    print("KERNEL_OK")
</pallas_src>

<mosaic_0001>
module attributes {stable_mosaic.version = 11 : i64} {
  func.func @_cvae_fwd_kernel(%arg0: i32, %arg1: memref<8x128xf32, #tpu.memory_space<vmem>>, %arg2: memref<8x128xf32, #tpu.memory_space<vmem>>, %arg3: memref<8x128xf32, #tpu.memory_space<vmem>>, %arg4: memref<128x128xf32, #tpu.memory_space<vmem>>, %arg5: memref<128x128xf32, #tpu.memory_space<vmem>>, %arg6: memref<1x128xf32, #tpu.memory_space<vmem>>, %arg7: memref<128x128xf32, #tpu.memory_space<vmem>>, %arg8: memref<1x128xf32, #tpu.memory_space<vmem>>, %arg9: memref<128x256xf32, #tpu.memory_space<vmem>>, %arg10: memref<1x256xf32, #tpu.memory_space<vmem>>, %arg11: memref<128x128xf32, #tpu.memory_space<vmem>>, %arg12: memref<128x128xf32, #tpu.memory_space<vmem>>, %arg13: memref<1x128xf32, #tpu.memory_space<vmem>>, %arg14: memref<128x128xf32, #tpu.memory_space<vmem>>, %arg15: memref<1x128xf32, #tpu.memory_space<vmem>>, %arg16: memref<128x128xf32, #tpu.memory_space<vmem>>, %arg17: memref<1x128xf32, #tpu.memory_space<vmem>>, %arg18: memref<8x128xf32, #tpu.memory_space<vmem>>, %arg19: memref<8x128xf32, #tpu.memory_space<vmem>>, %arg20: memref<8x128xf32, #tpu.memory_space<vmem>>) attributes {dimension_semantics = [#tpu.dimension_semantics<parallel>], iteration_bounds = array<i64: 1>, scalar_prefetch = 0 : i64, scratch_operands = 0 : i64, tpu.core_type = #tpu.core_type<tc>, window_params = [{transform_indices = @transform_0, window_bounds = array<i64: 8, 128>}, {transform_indices = @transform_1, window_bounds = array<i64: 8, 128>}, {transform_indices = @transform_2, window_bounds = array<i64: 8, 128>}, {pipeline_mode = #tpu.pipeline_mode<synchronous>, transform_indices = @transform_3, window_bounds = array<i64: 128, 128>}, {pipeline_mode = #tpu.pipeline_mode<synchronous>, transform_indices = @transform_4, window_bounds = array<i64: 128, 128>}, {pipeline_mode = #tpu.pipeline_mode<synchronous>, transform_indices = @transform_5, window_bounds = array<i64: 1, 128>}, {pipeline_mode = #tpu.pipeline_mode<synchronous>, transform_indices = @transform_6, window_bounds = array<i64: 128, 128>}, {pipeline_mode = #tpu.pipeline_mode<synchronous>, transform_indices = @transform_7, window_bounds = array<i64: 1, 128>}, {pipeline_mode = #tpu.pipeline_mode<synchronous>, transform_indices = @transform_8, window_bounds = array<i64: 128, 256>}, {pipeline_mode = #tpu.pipeline_mode<synchronous>, transform_indices = @transform_9, window_bounds = array<i64: 1, 256>}, {pipeline_mode = #tpu.pipeline_mode<synchronous>, transform_indices = @transform_10, window_bounds = array<i64: 128, 128>}, {pipeline_mode = #tpu.pipeline_mode<synchronous>, transform_indices = @transform_11, window_bounds = array<i64: 128, 128>}, {pipeline_mode = #tpu.pipeline_mode<synchronous>, transform_indices = @transform_12, window_bounds = array<i64: 1, 128>}, {pipeline_mode = #tpu.pipeline_mode<synchronous>, transform_indices = @transform_13, window_bounds = array<i64: 128, 128>}, {pipeline_mode = #tpu.pipeline_mode<synchronous>, transform_indices = @transform_14, window_bounds = array<i64: 1, 128>}, {pipeline_mode = #tpu.pipeline_mode<synchronous>, transform_indices = @transform_15, window_bounds = array<i64: 128, 128>}, {pipeline_mode = #tpu.pipeline_mode<synchronous>, transform_indices = @transform_16, window_bounds = array<i64: 1, 128>}, {transform_indices = @transform_17, window_bounds = array<i64: 8, 128>}, {transform_indices = @transform_18, window_bounds = array<i64: 8, 128>}, {transform_indices = @transform_19, window_bounds = array<i64: 8, 128>}]} {
    %c0 = arith.constant 0 : index
    %c0_0 = arith.constant 0 : index
    %0 = vector.load %arg1[%c0, %c0_0] : memref<8x128xf32, #tpu.memory_space<vmem>>, vector<8x128xf32>
    %c0_1 = arith.constant 0 : index
    %c0_2 = arith.constant 0 : index
    %1 = vector.load %arg2[%c0_1, %c0_2] : memref<8x128xf32, #tpu.memory_space<vmem>>, vector<8x128xf32>
    %c0_3 = arith.constant 0 : index
    %c0_4 = arith.constant 0 : index
    %2 = vector.load %arg3[%c0_3, %c0_4] : memref<8x128xf32, #tpu.memory_space<vmem>>, vector<8x128xf32>
    %c0_5 = arith.constant 0 : index
    %c0_6 = arith.constant 0 : index
    %3 = vector.load %arg4[%c0_5, %c0_6] : memref<128x128xf32, #tpu.memory_space<vmem>>, vector<128x128xf32>
    %c0_7 = arith.constant 0 : index
    %c0_8 = arith.constant 0 : index
    %4 = vector.load %arg5[%c0_7, %c0_8] : memref<128x128xf32, #tpu.memory_space<vmem>>, vector<128x128xf32>
    %c0_9 = arith.constant 0 : index
    %c0_10 = arith.constant 0 : index
    %5 = vector.load %arg6[%c0_9, %c0_10] : memref<1x128xf32, #tpu.memory_space<vmem>>, vector<1x128xf32>
    %cst = arith.constant dense<0.000000e+00> : vector<8x128xf32>
    %6 = tpu.matmul %0, %3, %cst {dimension_numbers = #tpu.dot_dimension_numbers<[1], [0], [0], [1], [0, 0, 1, 1], [], []>} : vector<8x128xf32>, vector<128x128xf32>, vector<8x128xf32> -> vector<8x128xf32>
    %cst_11 = arith.constant dense<0.000000e+00> : vector<8x128xf32>
    %7 = tpu.matmul %1, %4, %cst_11 {dimension_numbers = #tpu.dot_dimension_numbers<[1], [0], [0], [1], [0, 0, 1, 1], [], []>} : vector<8x128xf32>, vector<128x128xf32>, vector<8x128xf32> -> vector<8x128xf32>
    %8 = arith.addf %6, %7 : vector<8x128xf32>
    %9 = vector.broadcast %5 : vector<1x128xf32> to vector<8x128xf32>
    %10 = arith.addf %8, %9 : vector<8x128xf32>
    %cst_12 = arith.constant 0.000000e+00 : f32
    %11 = vector.broadcast %cst_12 : f32 to vector<8x128xf32>
    %12 = arith.maximumf %10, %11 : vector<8x128xf32>
    %c0_13 = arith.constant 0 : index
    %c0_14 = arith.constant 0 : index
    %13 = vector.load %arg7[%c0_13, %c0_14] : memref<128x128xf32, #tpu.memory_space<vmem>>, vector<128x128xf32>
    %c0_15 = arith.constant 0 : index
    %c0_16 = arith.constant 0 : index
    %14 = vector.load %arg8[%c0_15, %c0_16] : memref<1x128xf32, #tpu.memory_space<vmem>>, vector<1x128xf32>
    %cst_17 = arith.constant dense<0.000000e+00> : vector<8x128xf32>
    %15 = tpu.matmul %12, %13, %cst_17 {dimension_numbers = #tpu.dot_dimension_numbers<[1], [0], [0], [1], [0, 0, 1, 1], [], []>} : vector<8x128xf32>, vector<128x128xf32>, vector<8x128xf32> -> vector<8x128xf32>
    %16 = vector.broadcast %14 : vector<1x128xf32> to vector<8x128xf32>
    %17 = arith.addf %15, %16 : vector<8x128xf32>
    %cst_18 = arith.constant 0.000000e+00 : f32
    %18 = vector.broadcast %cst_18 : f32 to vector<8x128xf32>
    %19 = arith.maximumf %17, %18 : vector<8x128xf32>
    %c0_19 = arith.constant 0 : index
    %c0_20 = arith.constant 0 : index
    %20 = vector.load %arg9[%c0_19, %c0_20] : memref<128x256xf32, #tpu.memory_space<vmem>>, vector<128x256xf32>
    %c0_21 = arith.constant 0 : index
    %c0_22 = arith.constant 0 : index
    %21 = vector.load %arg10[%c0_21, %c0_22] : memref<1x256xf32, #tpu.memory_space<vmem>>, vector<1x256xf32>
    %cst_23 = arith.constant dense<0.000000e+00> : vector<8x256xf32>
    %22 = tpu.matmul %19, %20, %cst_23 {dimension_numbers = #tpu.dot_dimension_numbers<[1], [0], [0], [1], [0, 0, 1, 1], [], []>} : vector<8x128xf32>, vector<128x256xf32>, vector<8x256xf32> -> vector<8x256xf32>
    %23 = vector.broadcast %21 : vector<1x256xf32> to vector<8x256xf32>
    %24 = arith.addf %22, %23 : vector<8x256xf32>
    %25 = vector.extract_strided_slice %24 {offsets = [0, 0], sizes = [8, 128], strides = [1, 1]} : vector<8x256xf32> to vector<8x128xf32>
    %26 = vector.extract_strided_slice %24 {offsets = [0, 128], sizes = [8, 128], strides = [1, 1]} : vector<8x256xf32> to vector<8x128xf32>
    %cst_24 = arith.constant 5.000000e-01 : f32
    %27 = vector.broadcast %cst_24 : f32 to vector<8x128xf32>
    %28 = arith.mulf %27, %26 : vector<8x128xf32>
    %29 = math.exp %28 : vector<8x128xf32>
    %30 = arith.mulf %2, %29 : vector<8x128xf32>
    %31 = arith.addf %25, %30 : vector<8x128xf32>
    %c0_25 = arith.constant 0 : index
    %c0_26 = arith.constant 0 : index
    %32 = vector.load %arg11[%c0_25, %c0_26] : memref<128x128xf32, #tpu.memory_space<vmem>>, vector<128x128xf32>
    %c0_27 = arith.constant 0 : index
    %c0_28 = arith.constant 0 : index
    %33 = vector.load %arg12[%c0_27, %c0_28] : memref<128x128xf32, #tpu.memory_space<vmem>>, vector<128x128xf32>
    %c0_29 = arith.constant 0 : index
    %c0_30 = arith.constant 0 : index
    %34 = vector.load %arg13[%c0_29, %c0_30] : memref<1x128xf32, #tpu.memory_space<vmem>>, vector<1x128xf32>
    %cst_31 = arith.constant dense<0.000000e+00> : vector<8x128xf32>
    %35 = tpu.matmul %31, %32, %cst_31 {dimension_numbers = #tpu.dot_dimension_numbers<[1], [0], [0], [1], [0, 0, 1, 1], [], []>} : vector<8x128xf32>, vector<128x128xf32>, vector<8x128xf32> -> vector<8x128xf32>
    %cst_32 = arith.constant dense<0.000000e+00> : vector<8x128xf32>
    %36 = tpu.matmul %1, %33, %cst_32 {dimension_numbers = #tpu.dot_dimension_numbers<[1], [0], [0], [1], [0, 0, 1, 1], [], []>} : vector<8x128xf32>, vector<128x128xf32>, vector<8x128xf32> -> vector<8x128xf32>
    %37 = arith.addf %35, %36 : vector<8x128xf32>
    %38 = vector.broadcast %34 : vector<1x128xf32> to vector<8x128xf32>
    %39 = arith.addf %37, %38 : vector<8x128xf32>
    %cst_33 = arith.constant 0.000000e+00 : f32
    %40 = vector.broadcast %cst_33 : f32 to vector<8x128xf32>
    %41 = arith.maximumf %39, %40 : vector<8x128xf32>
    %c0_34 = arith.constant 0 : index
    %c0_35 = arith.constant 0 : index
    %42 = vector.load %arg14[%c0_34, %c0_35] : memref<128x128xf32, #tpu.memory_space<vmem>>, vector<128x128xf32>
    %c0_36 = arith.constant 0 : index
    %c0_37 = arith.constant 0 : index
    %43 = vector.load %arg15[%c0_36, %c0_37] : memref<1x128xf32, #tpu.memory_space<vmem>>, vector<1x128xf32>
    %cst_38 = arith.constant dense<0.000000e+00> : vector<8x128xf32>
    %44 = tpu.matmul %41, %42, %cst_38 {dimension_numbers = #tpu.dot_dimension_numbers<[1], [0], [0], [1], [0, 0, 1, 1], [], []>} : vector<8x128xf32>, vector<128x128xf32>, vector<8x128xf32> -> vector<8x128xf32>
    %45 = vector.broadcast %43 : vector<1x128xf32> to vector<8x128xf32>
    %46 = arith.addf %44, %45 : vector<8x128xf32>
    %cst_39 = arith.constant 0.000000e+00 : f32
    %47 = vector.broadcast %cst_39 : f32 to vector<8x128xf32>
    %48 = arith.maximumf %46, %47 : vector<8x128xf32>
    %c0_40 = arith.constant 0 : index
    %c0_41 = arith.constant 0 : index
    %49 = vector.load %arg16[%c0_40, %c0_41] : memref<128x128xf32, #tpu.memory_space<vmem>>, vector<128x128xf32>
    %c0_42 = arith.constant 0 : index
    %c0_43 = arith.constant 0 : index
    %50 = vector.load %arg17[%c0_42, %c0_43] : memref<1x128xf32, #tpu.memory_space<vmem>>, vector<1x128xf32>
    %cst_44 = arith.constant dense<0.000000e+00> : vector<8x128xf32>
    %51 = tpu.matmul %48, %49, %cst_44 {dimension_numbers = #tpu.dot_dimension_numbers<[1], [0], [0], [1], [0, 0, 1, 1], [], []>} : vector<8x128xf32>, vector<128x128xf32>, vector<8x128xf32> -> vector<8x128xf32>
    %52 = vector.broadcast %50 : vector<1x128xf32> to vector<8x128xf32>
    %53 = arith.addf %51, %52 : vector<8x128xf32>
    %54 = arith.negf %53 : vector<8x128xf32>
    %55 = math.exp %54 : vector<8x128xf32>
    %cst_45 = arith.constant 1.000000e+00 : f32
    %56 = vector.broadcast %cst_45 : f32 to vector<8x128xf32>
    %57 = arith.addf %56, %55 : vector<8x128xf32>
    %58 = arith.divf %56, %57 : vector<8x128xf32>
    %c0_46 = arith.constant 0 : index
    %c0_47 = arith.constant 0 : index
    %59 = vector.load %arg18[%c0_46, %c0_47] : memref<8x128xf32, #tpu.memory_space<vmem>>, vector<8x128xf32>
    tpu.vector_store %arg18[%c0_46, %c0_47], %58 {strides = array<i32>} : memref<8x128xf32, #tpu.memory_space<vmem>>, vector<8x128xf32>,
    %c0_48 = arith.constant 0 : index
    %c0_49 = arith.constant 0 : index
    %60 = vector.load %arg19[%c0_48, %c0_49] : memref<8x128xf32, #tpu.memory_space<vmem>>, vector<8x128xf32>
    tpu.vector_store %arg19[%c0_48, %c0_49], %25 {strides = array<i32>} : memref<8x128xf32, #tpu.memory_space<vmem>>, vector<8x128xf32>,
    %c0_50 = arith.constant 0 : index
    %c0_51 = arith.constant 0 : index
    %61 = vector.load %arg20[%c0_50, %c0_51] : memref<8x128xf32, #tpu.memory_space<vmem>>, vector<8x128xf32>
    tpu.vector_store %arg20[%c0_50, %c0_51], %26 {strides = array<i32>} : memref<8x128xf32, #tpu.memory_space<vmem>>, vector<8x128xf32>,
    return
  }
  func.func @transform_0(%arg0: i32) -> (i32, i32) {
    %c0_i32 = arith.constant 0 : i32
    %c0_i32_0 = arith.constant 0 : i32
    return %arg0, %c0_i32 : i32, i32
  }
  func.func @transform_1(%arg0: i32) -> (i32, i32) {
    %c0_i32 = arith.constant 0 : i32
    %c0_i32_0 = arith.constant 0 : i32
    return %arg0, %c0_i32 : i32, i32
  }
  func.func @transform_2(%arg0: i32) -> (i32, i32) {
    %c0_i32 = arith.constant 0 : i32
    %c0_i32_0 = arith.constant 0 : i32
    return %arg0, %c0_i32 : i32, i32
  }
  func.func @transform_3(%arg0: i32) -> (i32, i32) {
    %c0_i32 = arith.constant 0 : i32
    %c0_i32_0 = arith.constant 0 : i32
    %c0_i32_1 = arith.constant 0 : i32
    return %c0_i32, %c0_i32_0 : i32, i32
  }
  func.func @transform_4(%arg0: i32) -> (i32, i32) {
    %c0_i32 = arith.constant 0 : i32
    %c0_i32_0 = arith.constant 0 : i32
    %c0_i32_1 = arith.constant 0 : i32
    return %c0_i32, %c0_i32_0 : i32, i32
  }
  func.func @transform_5(%arg0: i32) -> (i32, i32) {
    %c0_i32 = arith.constant 0 : i32
    %c0_i32_0 = arith.constant 0 : i32
    %c0_i32_1 = arith.constant 0 : i32
    return %c0_i32, %c0_i32_0 : i32, i32
  }
  func.func @transform_6(%arg0: i32) -> (i32, i32) {
    %c0_i32 = arith.constant 0 : i32
    %c0_i32_0 = arith.constant 0 : i32
    %c0_i32_1 = arith.constant 0 : i32
    return %c0_i32, %c0_i32_0 : i32, i32
  }
  func.func @transform_7(%arg0: i32) -> (i32, i32) {
    %c0_i32 = arith.constant 0 : i32
    %c0_i32_0 = arith.constant 0 : i32
    %c0_i32_1 = arith.constant 0 : i32
    return %c0_i32, %c0_i32_0 : i32, i32
  }
  func.func @transform_8(%arg0: i32) -> (i32, i32) {
    %c0_i32 = arith.constant 0 : i32
    %c0_i32_0 = arith.constant 0 : i32
    %c0_i32_1 = arith.constant 0 : i32
    return %c0_i32, %c0_i32_0 : i32, i32
  }
  func.func @transform_9(%arg0: i32) -> (i32, i32) {
    %c0_i32 = arith.constant 0 : i32
    %c0_i32_0 = arith.constant 0 : i32
    %c0_i32_1 = arith.constant 0 : i32
    return %c0_i32, %c0_i32_0 : i32, i32
  }
  func.func @transform_10(%arg0: i32) -> (i32, i32) {
    %c0_i32 = arith.constant 0 : i32
    %c0_i32_0 = arith.constant 0 : i32
    %c0_i32_1 = arith.constant 0 : i32
    return %c0_i32, %c0_i32_0 : i32, i32
  }
  func.func @transform_11(%arg0: i32) -> (i32, i32) {
    %c0_i32 = arith.constant 0 : i32
    %c0_i32_0 = arith.constant 0 : i32
    %c0_i32_1 = arith.constant 0 : i32
    return %c0_i32, %c0_i32_0 : i32, i32
  }
  func.func @transform_12(%arg0: i32) -> (i32, i32) {
    %c0_i32 = arith.constant 0 : i32
    %c0_i32_0 = arith.constant 0 : i32
    %c0_i32_1 = arith.constant 0 : i32
    return %c0_i32, %c0_i32_0 : i32, i32
  }
  func.func @transform_13(%arg0: i32) -> (i32, i32) {
    %c0_i32 = arith.constant 0 : i32
    %c0_i32_0 = arith.constant 0 : i32
    %c0_i32_1 = arith.constant 0 : i32
    return %c0_i32, %c0_i32_0 : i32, i32
  }
  func.func @transform_14(%arg0: i32) -> (i32, i32) {
    %c0_i32 = arith.constant 0 : i32
    %c0_i32_0 = arith.constant 0 : i32
    %c0_i32_1 = arith.constant 0 : i32
    return %c0_i32, %c0_i32_0 : i32, i32
  }
  func.func @transform_15(%arg0: i32) -> (i32, i32) {
    %c0_i32 = arith.constant 0 : i32
    %c0_i32_0 = arith.constant 0 : i32
    %c0_i32_1 = arith.constant 0 : i32
    return %c0_i32, %c0_i32_0 : i32, i32
  }
  func.func @transform_16(%arg0: i32) -> (i32, i32) {
    %c0_i32 = arith.constant 0 : i32
    %c0_i32_0 = arith.constant 0 : i32
    %c0_i32_1 = arith.constant 0 : i32
    return %c0_i32, %c0_i32_0 : i32, i32
  }
  func.func @transform_17(%arg0: i32) -> (i32, i32) {
    %c0_i32 = arith.constant 0 : i32
    %c0_i32_0 = arith.constant 0 : i32
    return %arg0, %c0_i32 : i32, i32
  }
  func.func @transform_18(%arg0: i32) -> (i32, i32) {
    %c0_i32 = arith.constant 0 : i32
    %c0_i32_0 = arith.constant 0 : i32
    return %arg0, %c0_i32 : i32, i32
  }
  func.func @transform_19(%arg0: i32) -> (i32, i32) {
    %c0_i32 = arith.constant 0 : i32
    %c0_i32_0 = arith.constant 0 : i32
    return %arg0, %c0_i32 : i32, i32
  }
}

</mosaic_0001>

<llo_original>
// kernel: cvae_forward.1
$region0: #{cvae_forward.1}
  #allocation0 [shape = 'u32[]', space=smem, size = 0x4, offset = 0x4, fixed_abs, tag = 'smem constant byte address 0x4 - core index']
  #allocation1 [shape = 'u32[72,128]{1,0:T(1,128)}', space=vmem, size = 0x9000, scoped, tag = 'internal scratch']
  %s0 = inlined_call_operand.vmem [shape: f32[8,128], index: 0, kind: input, shape index: {}]
  %s1 = inlined_call_operand.vmem [shape: f32[8,128], index: 1, kind: input, shape index: {}]
  %s2 = inlined_call_operand.vmem [shape: f32[8,128], index: 2, kind: input, shape index: {}]
  %s3 = inlined_call_operand.hbm [shape: f32[128,128], index: 3, kind: input, shape index: {}]
  %s4 = inlined_call_operand.hbm [shape: f32[128,128], index: 4, kind: input, shape index: {}]
  %s5 = inlined_call_operand.vmem [shape: f32[1,128], index: 5, kind: input, shape index: {}]
  %s6 = inlined_call_operand.hbm [shape: f32[128,128], index: 6, kind: input, shape index: {}]
  %s7 = inlined_call_operand.vmem [shape: f32[1,128], index: 7, kind: input, shape index: {}]
  %s8 = inlined_call_operand.hbm [shape: f32[128,256], index: 8, kind: input, shape index: {}]
  %s9 = inlined_call_operand.vmem [shape: f32[1,256], index: 9, kind: input, shape index: {}]
  %s10 = inlined_call_operand.hbm [shape: f32[128,128], index: 10, kind: input, shape index: {}]
  %s11 = inlined_call_operand.hbm [shape: f32[128,128], index: 11, kind: input, shape index: {}]
  %s12 = inlined_call_operand.vmem [shape: f32[1,128], index: 12, kind: input, shape index: {}]
  %s13 = inlined_call_operand.hbm [shape: f32[128,128], index: 13, kind: input, shape index: {}]
  %s14 = inlined_call_operand.vmem [shape: f32[1,128], index: 14, kind: input, shape index: {}]
  %s15 = inlined_call_operand.hbm [shape: f32[128,128], index: 15, kind: input, shape index: {}]
  %s16 = inlined_call_operand.vmem [shape: f32[1,128], index: 16, kind: input, shape index: {}]
  %s17 = inlined_call_operand.vmem [shape: f32[8,128], index: 17, kind: output, shape index: {0}]
  %s18 = inlined_call_operand.vmem [shape: f32[8,128], index: 18, kind: output, shape index: {1}]
  %s19 = inlined_call_operand.vmem [shape: f32[8,128], index: 19, kind: output, shape index: {2}]
  %20 = xla_tuple %s17, %s18, %s19
  %s21 = sld [smem:[#allocation0]]
  $region126: #{cvae_forward.1} parent=0
    _
  %s23 = ssub.s32 1, %s21
  %s24 = scalar_select 0, %s23, %s21
  $region1: #{cvae_forward.1} parent=0
    #allocation2 [shape = 'u8[65536]{0}', space=vmem, size = 0x10000, scoped, tag = 'input window, operand 3, single buffered']
    #allocation3 [shape = 's32[1]{0}', space=sflag, size = 0x4, scoped, tag = 'scoped memory for cvae_forward.1']
    #allocation4 [shape = 'u8[65536]{0}', space=vmem, size = 0x10000, scoped, tag = 'input window, operand 4, single buffered']
    #allocation5 [shape = 's32[1]{0}', space=sflag, size = 0x4, scoped, tag = 'scoped memory for cvae_forward.1']
    #allocation6 [shape = 'u8[65536]{0}', space=vmem, size = 0x10000, scoped, tag = 'input window, operand 6, single buffered']
    #allocation7 [shape = 'u8[131072]{0}', space=vmem, size = 0x20000, scoped, tag = 'input window, operand 8, single buffered']
    #allocation8 [shape = 's32[1]{0}', space=sflag, size = 0x4, scoped, tag = 'scoped memory for cvae_forward.1']
    #allocation9 [shape = 'u8[65536]{0}', space=vmem, size = 0x10000, scoped, tag = 'input window, operand 10, single buffered']
    #allocation10 [shape = 'u8[65536]{0}', space=vmem, size = 0x10000, scoped, tag = 'input window, operand 11, single buffered']
    #allocation11 [shape = 's32[1]{0}', space=sflag, size = 0x4, scoped, tag = 'scoped memory for cvae_forward.1']
    #allocation12 [shape = 'u8[65536]{0}', space=vmem, size = 0x10000, scoped, tag = 'input window, operand 13, single buffered']
    #allocation13 [shape = 'u8[65536]{0}', space=vmem, size = 0x10000, scoped, tag = 'input window, operand 15, single buffered']
    #allocation14 [shape = 's32[1]{0}', space=sflag, size = 0x4, scoped, tag = 'scoped memory for cvae_forward.1']
    %25 = vsyncpa [#allocation3], 0
    %26 = vsyncpa [#allocation5], 0
    %27 = vsyncpa [#allocation8], 0
    %28 = vsyncpa [#allocation11], 0
    %29 = vsyncpa [#allocation14], 0
    // Predicated region
    $region2: #{cvae_forward.1} parent=1 // pred_check
      _
    $region3: #{cvae_forward.1} parent=1 // pred_check_branch
      %31 = sbr.rel (0) target = $region5
    $region4: #{cvae_forward.1} parent=1 // pred_region
      _
    $region5: #{cvae_forward.1} parent=1 // pred_fallthru
      _
    // Predicated region
    $region6: #{cvae_forward.1} parent=1 // pred_check
      _
    $region7: #{cvae_forward.1} parent=1 // pred_check_branch
      %33 = sbr.rel (0) target = $region9
    $region8: #{cvae_forward.1} parent=1 // pred_region
      _
    $region9: #{cvae_forward.1} parent=1 // pred_fallthru
      _
    // Predicated region
    $region10: #{cvae_forward.1} parent=1 // pred_check
      _
    $region11: #{cvae_forward.1} parent=1 // pred_check_branch
      %35 = sbr.rel (0) target = $region13
    $region12: #{cvae_forward.1} parent=1 // pred_region
      _
    $region13: #{cvae_forward.1} parent=1 // pred_fallthru
      _
    // Predicated region
    $region14: #{cvae_forward.1} parent=1 // pred_check
      _
    $region15: #{cvae_forward.1} parent=1 // pred_check_branch
      %37 = sbr.rel (0) target = $region17
    $region16: #{cvae_forward.1} parent=1 // pred_region
      %39 = vsyncadd [#allocation3], 0
      %s40 = sshll.u32 %s3, 4
      %s41 = int_to_ptr.hbm [resolvable:$true] %s40
      %s42 = sshll.u32 [#allocation2], 4
      %s43 = int_to_ptr.vmem [resolvable:$true] %s42
      %48 = dma.hbm_to_vmem [thread:$0]  %s41, 2048, %s43, [#allocation3], 128, 128, 8
    $region17: #{cvae_forward.1} parent=1 // pred_fallthru
      _
    // Predicated region
    $region18: #{cvae_forward.1} parent=1 // pred_check
      _
    $region19: #{cvae_forward.1} parent=1 // pred_check_branch
      %50 = sbr.rel (0) target = $region21
    $region20: #{cvae_forward.1} parent=1 // pred_region
      %52 = vsyncadd [#allocation5], 0
      %s53 = sshll.u32 %s4, 4
      %s54 = int_to_ptr.hbm [resolvable:$true] %s53
      %s55 = sshll.u32 [#allocation4], 4
      %s56 = int_to_ptr.vmem [resolvable:$true] %s55
      %61 = dma.hbm_to_vmem [thread:$0]  %s54, 2048, %s56, [#allocation5], 128, 128, 8
    $region21: #{cvae_forward.1} parent=1 // pred_fallthru
      _
    // Predicated region
    $region22: #{cvae_forward.1} parent=1 // pred_check
      _
    $region23: #{cvae_forward.1} parent=1 // pred_check_branch
      %63 = sbr.rel (0) target = $region25
    $region24: #{cvae_forward.1} parent=1 // pred_region
      _
    $region25: #{cvae_forward.1} parent=1 // pred_fallthru
      _
    // Predicated region
    $region26: #{cvae_forward.1} parent=1 // pred_check
      _
    $region27: #{cvae_forward.1} parent=1 // pred_check_branch
      %65 = sbr.rel (0) target = $region29
    $region28: #{cvae_forward.1} parent=1 // pred_region
      %67 = vsyncadd [#allocation5], 0
      %s68 = sshll.u32 %s6, 4
      %s69 = int_to_ptr.hbm [resolvable:$true] %s68
      %s70 = sshll.u32 [#allocation6], 4
      %s71 = int_to_ptr.vmem [resolvable:$true] %s70
      %76 = dma.hbm_to_vmem [thread:$0]  %s69, 2048, %s71, [#allocation5], 128, 128, 8
    $region29: #{cvae_forward.1} parent=1 // pred_fallthru
      _
    // Predicated region
    $region30: #{cvae_forward.1} parent=1 // pred_check
      _
    $region31: #{cvae_forward.1} parent=1 // pred_check_branch
      %78 = sbr.rel (0) target = $region33
    $region32: #{cvae_forward.1} parent=1 // pred_region
      _
    $region33: #{cvae_forward.1} parent=1 // pred_fallthru
      _
    // Predicated region
    $region34: #{cvae_forward.1} parent=1 // pred_check
      _
    $region35: #{cvae_forward.1} parent=1 // pred_check_branch
      %80 = sbr.rel (0) target = $region37
    $region36: #{cvae_forward.1} parent=1 // pred_region
      %82 = vsyncadd [#allocation8], 0
      %s83 = sshll.u32 %s8, 4
      %s84 = int_to_ptr.hbm [resolvable:$true] %s83
      %s85 = sshll.u32 [#allocation7], 4
      %s86 = int_to_ptr.vmem [resolvable:$true] %s85
      %91 = dma.hbm_to_vmem [thread:$0]  %s84, 4096, %s86, [#allocation8], 256, 256, 16
    $region37: #{cvae_forward.1} parent=1 // pred_fallthru
      _
    // Predicated region
    $region38: #{cvae_forward.1} parent=1 // pred_check
      _
    $region39: #{cvae_forward.1} parent=1 // pred_check_branch
      %93 = sbr.rel (0) target = $region41
    $region40: #{cvae_forward.1} parent=1 // pred_region
      _
    $region41: #{cvae_forward.1} parent=1 // pred_fallthru
      _
    // Predicated region
    $region42: #{cvae_forward.1} parent=1 // pred_check
      _
    $region43: #{cvae_forward.1} parent=1 // pred_check_branch
      %95 = sbr.rel (0) target = $region45
    $region44: #{cvae_forward.1} parent=1 // pred_region
      %97 = vsyncadd [#allocation8], 0
      %s98 = sshll.u32 %s10, 4
      %s99 = int_to_ptr.hbm [resolvable:$true] %s98
      %s100 = sshll.u32 [#allocation9], 4
      %s101 = int_to_ptr.vmem [resolvable:$true] %s100
      %106 = dma.hbm_to_vmem [thread:$0]  %s99, 2048, %s101, [#allocation8], 128, 128, 8
    $region45: #{cvae_forward.1} parent=1 // pred_fallthru
      _
    // Predicated region
    $region46: #{cvae_forward.1} parent=1 // pred_check
      _
    $region47: #{cvae_forward.1} parent=1 // pred_check_branch
      %108 = sbr.rel (0) target = $region49
    $region48: #{cvae_forward.1} parent=1 // pred_region
      %110 = vsyncadd [#allocation11], 0
      %s111 = sshll.u32 %s11, 4
      %s112 = int_to_ptr.hbm [resolvable:$true] %s111
      %s113 = sshll.u32 [#allocation10], 4
      %s114 = int_to_ptr.vmem [resolvable:$true] %s113
      %119 = dma.hbm_to_vmem [thread:$0]  %s112, 2048, %s114, [#allocation11], 128, 128, 8
    $region49: #{cvae_forward.1} parent=1 // pred_fallthru
      _
    // Predicated region
    $region50: #{cvae_forward.1} parent=1 // pred_check
      _
    $region51: #{cvae_forward.1} parent=1 // pred_check_branch
      %121 = sbr.rel (0) target = $region53
    $region52: #{cvae_forward.1} parent=1 // pred_region
      _
    $region53: #{cvae_forward.1} parent=1 // pred_fallthru
      _
    // Predicated region
    $region54: #{cvae_forward.1} parent=1 // pred_check
      _
    $region55: #{cvae_forward.1} parent=1 // pred_check_branch
      %123 = sbr.rel (0) target = $region57
    $region56: #{cvae_forward.1} parent=1 // pred_region
      %125 = vsyncadd [#allocation11], 0
      %s126 = sshll.u32 %s13, 4
      %s127 = int_to_ptr.hbm [resolvable:$true] %s126
      %s128 = sshll.u32 [#allocation12], 4
      %s129 = int_to_ptr.vmem [resolvable:$true] %s128
      %134 = dma.hbm_to_vmem [thread:$0]  %s127, 2048, %s129, [#allocation11], 128, 128, 8
    $region57: #{cvae_forward.1} parent=1 // pred_fallthru
      _
    // Predicated region
    $region58: #{cvae_forward.1} parent=1 // pred_check
      _
    $region59: #{cvae_forward.1} parent=1 // pred_check_branch
      %136 = sbr.rel (0) target = $region61
    $region60: #{cvae_forward.1} parent=1 // pred_region
      _
    $region61: #{cvae_forward.1} parent=1 // pred_fallthru
      _
    // Predicated region
    $region62: #{cvae_forward.1} parent=1 // pred_check
      _
    $region63: #{cvae_forward.1} parent=1 // pred_check_branch
      %138 = sbr.rel (0) target = $region65
    $region64: #{cvae_forward.1} parent=1 // pred_region
      %140 = vsyncadd [#allocation14], 0
      %s141 = sshll.u32 %s15, 4
      %s142 = int_to_ptr.hbm [resolvable:$true] %s141
      %s143 = sshll.u32 [#allocation13], 4
      %s144 = int_to_ptr.vmem [resolvable:$true] %s143
      %149 = dma.hbm_to_vmem [thread:$0]  %s142, 2048, %s144, [#allocation14], 128, 128, 8
    $region65: #{cvae_forward.1} parent=1 // pred_fallthru
      _
    // Predicated region
    $region66: #{cvae_forward.1} parent=1 // pred_check
      _
    $region67: #{cvae_forward.1} parent=1 // pred_check_branch
      %151 = sbr.rel (0) target = $region69
    $region68: #{cvae_forward.1} parent=1 // pred_region
      _
    $region69: #{cvae_forward.1} parent=1 // pred_fallthru
      _
    // Predicated region
    $region70: #{cvae_forward.1} parent=1 // pred_check
      _
    $region71: #{cvae_forward.1} parent=1 // pred_check_branch
      %153 = sbr.rel (0) target = $region73
    $region72: #{cvae_forward.1} parent=1 // pred_region
      %155 = dma.done [#allocation3], 2048
    $region73: #{cvae_forward.1} parent=1 // pred_fallthru
      _
    // Predicated region
    $region74: #{cvae_forward.1} parent=1 // pred_check
      _
    $region75: #{cvae_forward.1} parent=1 // pred_check_branch
      %157 = sbr.rel (0) target = $region77
    $region76: #{cvae_forward.1} parent=1 // pred_region
      %159 = dma.done [#allocation5], 2048
    $region77: #{cvae_forward.1} parent=1 // pred_fallthru
      _
    // Predicated region
    $region78: #{cvae_forward.1} parent=1 // pred_check
      _
    $region79: #{cvae_forward.1} parent=1 // pred_check_branch
      %161 = sbr.rel (0) target = $region81
    $region80: #{cvae_forward.1} parent=1 // pred_region
      %163 = dma.done [#allocation5], 2048
    $region81: #{cvae_forward.1} parent=1 // pred_fallthru
      _
    // Predicated region
    $region82: #{cvae_forward.1} parent=1 // pred_check
      _
    $region83: #{cvae_forward.1} parent=1 // pred_check_branch
      %165 = sbr.rel (0) target = $region85
    $region84: #{cvae_forward.1} parent=1 // pred_region
      %167 = dma.done [#allocation8], 4096
    $region85: #{cvae_forward.1} parent=1 // pred_fallthru
      _
    // Predicated region
    $region86: #{cvae_forward.1} parent=1 // pred_check
      _
    $region87: #{cvae_forward.1} parent=1 // pred_check_branch
      %169 = sbr.rel (0) target = $region89
    $region88: #{cvae_forward.1} parent=1 // pred_region
      %171 = dma.done [#allocation8], 2048
    $region89: #{cvae_forward.1} parent=1 // pred_fallthru
      _
    // Predicated region
    $region90: #{cvae_forward.1} parent=1 // pred_check
      _
    $region91: #{cvae_forward.1} parent=1 // pred_check_branch
      %173 = sbr.rel (0) target = $region93
    $region92: #{cvae_forward.1} parent=1 // pred_region
      %175 = dma.done [#allocation11], 2048
    $region93: #{cvae_forward.1} parent=1 // pred_fallthru
      _
    // Predicated region
    $region94: #{cvae_forward.1} parent=1 // pred_check
      _
    $region95: #{cvae_forward.1} parent=1 // pred_check_branch
      %177 = sbr.rel (0) target = $region97
    $region96: #{cvae_forward.1} parent=1 // pred_region
      %179 = dma.done [#allocation11], 2048
    $region97: #{cvae_forward.1} parent=1 // pred_fallthru
      _
    // Predicated region
    $region98: #{cvae_forward.1} parent=1 // pred_check
      _
    $region99: #{cvae_forward.1} parent=1 // pred_check_branch
      %181 = sbr.rel (0) target = $region101
    $region100: #{cvae_forward.1} parent=1 // pred_region
      %183 = dma.done [#allocation14], 2048
    $region101: #{cvae_forward.1} parent=1 // pred_fallthru
      _
    %v184 = vld [vmem:[%s0] sm:$0xff]
    %v185 = vld [vmem:[%s1] sm:$0xff]
    %v186 = vld [vmem:[%s2] sm:$0xff]
    %v187 = vld [vmem:[#allocation2] sm:$0xff]
    %v188 = vld [vmem:[#allocation2 + $0x8] sm:$0xff]
    %v189 = vld [vmem:[#allocation2 + $0x10] sm:$0xff]
    %v190 = vld [vmem:[#allocation2 + $0x18] sm:$0xff]
    %v191 = vld [vmem:[#allocation2 + $0x20] sm:$0xff]
    %v192 = vld [vmem:[#allocation2 + $0x28] sm:$0xff]
    %v193 = vld [vmem:[#allocation2 + $0x30] sm:$0xff]
    %v194 = vld [vmem:[#allocation2 + $0x38] sm:$0xff]
    %v195 = vld [vmem:[#allocation2 + $0x40] sm:$0xff]
    %v196 = vld [vmem:[#allocation2 + $0x48] sm:$0xff]
    %v197 = vld [vmem:[#allocation2 + $0x50] sm:$0xff]
    %v198 = vld [vmem:[#allocation2 + $0x58] sm:$0xff]
    %v199 = vld [vmem:[#allocation2 + $0x60] sm:$0xff]
    %v200 = vld [vmem:[#allocation2 + $0x68] sm:$0xff]
    %v201 = vld [vmem:[#allocation2 + $0x70] sm:$0xff]
    %v202 = vld [vmem:[#allocation2 + $0x78] sm:$0xff]
    %v203 = vld [vmem:[#allocation4] sm:$0xff]
    %v204 = vld [vmem:[#allocation4 + $0x8] sm:$0xff]
    %v205 = vld [vmem:[#allocation4 + $0x10] sm:$0xff]
    %v206 = vld [vmem:[#allocation4 + $0x18] sm:$0xff]
    %v207 = vld [vmem:[#allocation4 + $0x20] sm:$0xff]
    %v208 = vld [vmem:[#allocation4 + $0x28] sm:$0xff]
    %v209 = vld [vmem:[#allocation4 + $0x30] sm:$0xff]
    %v210 = vld [vmem:[#allocation4 + $0x38] sm:$0xff]
    %v211 = vld [vmem:[#allocation4 + $0x40] sm:$0xff]
    %v212 = vld [vmem:[#allocation4 + $0x48] sm:$0xff]
    %v213 = vld [vmem:[#allocation4 + $0x50] sm:$0xff]
    %v214 = vld [vmem:[#allocation4 + $0x58] sm:$0xff]
    %v215 = vld [vmem:[#allocation4 + $0x60] sm:$0xff]
    %v216 = vld [vmem:[#allocation4 + $0x68] sm:$0xff]
    %v217 = vld [vmem:[#allocation4 + $0x70] sm:$0xff]
    %v218 = vld [vmem:[#allocation4 + $0x78] sm:$0xff]
    %v219 = vld [vmem:[%s5] sm:$0x1]
    %220 = vmatpush.msra.mxu0 %v218
    %221 = vmatpush.msra.mxu0 %v217
    %222 = vmatpush.msra.mxu0 %v216
    %223 = vmatpush.msra.mxu0 %v215
    %224 = vmatpush.msra.mxu0 %v214
    %225 = vmatpush.msra.mxu0 %v213
    %226 = vmatpush.msra.mxu0 %v212
    %227 = vmatpush.msra.mxu0 %v211
    %228 = vmatpush.msra.mxu0 %v210
    %229 = vmatpush.msra.mxu0 %v209
    %230 = vmatpush.msra.mxu0 %v208
    %231 = vmatpush.msra.mxu0 %v207
    %232 = vmatpush.msra.mxu0 %v206
    %233 = vmatpush.msra.mxu0 %v205
    %234 = vmatpush.msra.mxu0 %v204
    %235 = vmatpush.msra.mxu0 %v203
    %236 = vmatmul.f32.gmra.mxu0 %v185
    %v237 = vpop.f32.mrf.mxu0
    %v238 = vadd.f32 0.0, %v237
    %239 = vdwg.mxu0
    %240 = vmatpush.msra.mxu0 %v202
    %241 = vmatpush.msra.mxu0 %v201
    %242 = vmatpush.msra.mxu0 %v200
    %243 = vmatpush.msra.mxu0 %v199
    %244 = vmatpush.msra.mxu0 %v198
    %245 = vmatpush.msra.mxu0 %v197
    %246 = vmatpush.msra.mxu0 %v196
    %247 = vmatpush.msra.mxu0 %v195
    %248 = vmatpush.msra.mxu0 %v194
    %249 = vmatpush.msra.mxu0 %v193
    %250 = vmatpush.msra.mxu0 %v192
    %251 = vmatpush.msra.mxu0 %v191
    %252 = vmatpush.msra.mxu0 %v190
    %253 = vmatpush.msra.mxu0 %v189
    %254 = vmatpush.msra.mxu0 %v188
    %255 = vmatpush.msra.mxu0 %v187
    %256 = vmatmul.f32.gmra.mxu0 %v184
    %v257 = vpop.f32.mrf.mxu0
    %v258 = vadd.f32 %v238, %v257
    %259 = vdwg.mxu0
    %v261 = vperm.slane %v219, 0
    %v263 = vadd.f32 %v258, %v261
    %v264 = vmax.f32 %v263, 0.0
    %v265 = vld [vmem:[#allocation6] sm:$0xff]
    %v266 = vld [vmem:[#allocation6 + $0x8] sm:$0xff]
    %v267 = vld [vmem:[#allocation6 + $0x10] sm:$0xff]
    %v268 = vld [vmem:[#allocation6 + $0x18] sm:$0xff]
    %v269 = vld [vmem:[#allocation6 + $0x20] sm:$0xff]
    %v270 = vld [vmem:[#allocation6 + $0x28] sm:$0xff]
    %v271 = vld [vmem:[#allocation6 + $0x30] sm:$0xff]
    %v272 = vld [vmem:[#allocation6 + $0x38] sm:$0xff]
    %v273 = vld [vmem:[#allocation6 + $0x40] sm:$0xff]
    %v274 = vld [vmem:[#allocation6 + $0x48] sm:$0xff]
    %v275 = vld [vmem:[#allocation6 + $0x50] sm:$0xff]
    %v276 = vld [vmem:[#allocation6 + $0x58] sm:$0xff]
    %v277 = vld [vmem:[#allocation6 + $0x60] sm:$0xff]
    %v278 = vld [vmem:[#allocation6 + $0x68] sm:$0xff]
    %v279 = vld [vmem:[#allocation6 + $0x70] sm:$0xff]
    %v280 = vld [vmem:[#allocation6 + $0x78] sm:$0xff]
    %v281 = vld [vmem:[%s7] sm:$0x1]
    %v283 = vperm.slane %v281, 0
    %285 = vmatpush.msra.mxu0 %v280
    %286 = vmatpush.msra.mxu0 %v279
    %287 = vmatpush.msra.mxu0 %v278
    %288 = vmatpush.msra.mxu0 %v277
    %289 = vmatpush.msra.mxu0 %v276
    %290 = vmatpush.msra.mxu0 %v275
    %291 = vmatpush.msra.mxu0 %v274
    %292 = vmatpush.msra.mxu0 %v273
    %293 = vmatpush.msra.mxu0 %v272
    %294 = vmatpush.msra.mxu0 %v271
    %295 = vmatpush.msra.mxu0 %v270
    %296 = vmatpush.msra.mxu0 %v269
    %297 = vmatpush.msra.mxu0 %v268
    %298 = vmatpush.msra.mxu0 %v267
    %299 = vmatpush.msra.mxu0 %v266
    %300 = vmatpush.msra.mxu0 %v265
    %301 = vmatmul.f32.gmra.mxu0 %v264
    %v302 = vpop.f32.mrf.mxu0
    %v303 = vadd.f32 %v283, %v302
    %304 = vdwg.mxu0
    %v305 = vmax.f32 %v303, 0.0
    %v306 = vld [vmem:[#allocation7] sm:$0xff]
    %v307 = vld [vmem:[#allocation7 + $0x8] sm:$0xff]
    %v308 = vld [vmem:[#allocation7 + $0x10] sm:$0xff]
    %v309 = vld [vmem:[#allocation7 + $0x18] sm:$0xff]
    %v310 = vld [vmem:[#allocation7 + $0x20] sm:$0xff]
    %v311 = vld [vmem:[#allocation7 + $0x28] sm:$0xff]
    %v312 = vld [vmem:[#allocation7 + $0x30] sm:$0xff]
    %v313 = vld [vmem:[#allocation7 + $0x38] sm:$0xff]
    %v314 = vld [vmem:[#allocation7 + $0x40] sm:$0xff]
    %v315 = vld [vmem:[#allocation7 + $0x48] sm:$0xff]
    %v316 = vld [vmem:[#allocation7 + $0x50] sm:$0xff]
    %v317 = vld [vmem:[#allocation7 + $0x58] sm:$0xff]
    %v318 = vld [vmem:[#allocation7 + $0x60] sm:$0xff]
    %v319 = vld [vmem:[#allocation7 + $0x68] sm:$0xff]
    %v320 = vld [vmem:[#allocation7 + $0x70] sm:$0xff]
    %v321 = vld [vmem:[#allocation7 + $0x78] sm:$0xff]
    %v322 = vld [vmem:[#allocation7 + $0x80] sm:$0xff]
    %v323 = vld [vmem:[#allocation7 + $0x88] sm:$0xff]
    %v324 = vld [vmem:[#allocation7 + $0x90] sm:$0xff]
    %v325 = vld [vmem:[#allocation7 + $0x98] sm:$0xff]
    %v326 = vld [vmem:[#allocation7 + $0xa0] sm:$0xff]
    %v327 = vld [vmem:[#allocation7 + $0xa8] sm:$0xff]
    %v328 = vld [vmem:[#allocation7 + $0xb0] sm:$0xff]
    %v329 = vld [vmem:[#allocation7 + $0xb8] sm:$0xff]
    %v330 = vld [vmem:[#allocation7 + $0xc0] sm:$0xff]
    %v331 = vld [vmem:[#allocation7 + $0xc8] sm:$0xff]
    %v332 = vld [vmem:[#allocation7 + $0xd0] sm:$0xff]
    %v333 = vld [vmem:[#allocation7 + $0xd8] sm:$0xff]
    %v334 = vld [vmem:[#allocation7 + $0xe0] sm:$0xff]
    %v335 = vld [vmem:[#allocation7 + $0xe8] sm:$0xff]
    %v336 = vld [vmem:[#allocation7 + $0xf0] sm:$0xff]
    %v337 = vld [vmem:[#allocation7 + $0xf8] sm:$0xff]
    %v338 = vld [vmem:[%s9] sm:$0x3]
    %v340 = vperm.slane %v338, 0
    %v341 = vperm.slane %v338, 1
    %344 = vmatpush.msra.mxu0 %v336
    %345 = vmatpush.msra.mxu0 %v334
    %346 = vmatpush.msra.mxu0 %v332
    %347 = vmatpush.msra.mxu0 %v330
    %348 = vmatpush.msra.mxu0 %v328
    %349 = vmatpush.msra.mxu0 %v326
    %350 = vmatpush.msra.mxu0 %v324
    %351 = vmatpush.msra.mxu0 %v322
    %352 = vmatpush.msra.mxu0 %v320
    %353 = vmatpush.msra.mxu0 %v318
    %354 = vmatpush.msra.mxu0 %v316
    %355 = vmatpush.msra.mxu0 %v314
    %356 = vmatpush.msra.mxu0 %v312
    %357 = vmatpush.msra.mxu0 %v310
    %358 = vmatpush.msra.mxu0 %v308
    %359 = vmatpush.msra.mxu0 %v306
    %360 = vmatmul.f32.gmra.mxu0 %v305
    %v361 = vpop.f32.mrf.mxu0
    %v362 = vadd.f32 %v340, %v361
    %363 = vdwg.mxu0
    %364 = vmatpush.msra.mxu0 %v337
    %365 = vmatpush.msra.mxu0 %v335
    %366 = vmatpush.msra.mxu0 %v333
    %367 = vmatpush.msra.mxu0 %v331
    %368 = vmatpush.msra.mxu0 %v329
    %369 = vmatpush.msra.mxu0 %v327
    %370 = vmatpush.msra.mxu0 %v325
    %371 = vmatpush.msra.mxu0 %v323
    %372 = vmatpush.msra.mxu0 %v321
    %373 = vmatpush.msra.mxu0 %v319
    %374 = vmatpush.msra.mxu0 %v317
    %375 = vmatpush.msra.mxu0 %v315
    %376 = vmatpush.msra.mxu0 %v313
    %377 = vmatpush.msra.mxu0 %v311
    %378 = vmatpush.msra.mxu0 %v309
    %379 = vmatpush.msra.mxu0 %v307
    %380 = vmatmul.f32.gmra.mxu0 %v305
    %v381 = vpop.f32.mrf.mxu0
    %v382 = vadd.f32 %v341, %v381
    %383 = vdwg.mxu0
    %v384 = vmul.f32 %v382, 0.5
    %v385 = vmul.f32 %v384, 1.442695
    %v386 = vpow.pop %v385
    %v387 = vmul.f32 %v186, %v386
    %v388 = vadd.f32 %v362, %v387
    %v389 = vld [vmem:[#allocation9] sm:$0xff]
    %v390 = vld [vmem:[#allocation9 + $0x8] sm:$0xff]
    %v391 = vld [vmem:[#allocation9 + $0x10] sm:$0xff]
    %v392 = vld [vmem:[#allocation9 + $0x18] sm:$0xff]
    %v393 = vld [vmem:[#allocation9 + $0x20] sm:$0xff]
    %v394 = vld [vmem:[#allocation9 + $0x28] sm:$0xff]
    %v395 = vld [vmem:[#allocation9 + $0x30] sm:$0xff]
    %v396 = vld [vmem:[#allocation9 + $0x38] sm:$0xff]
    %v397 = vld [vmem:[#allocation9 + $0x40] sm:$0xff]
    %v398 = vld [vmem:[#allocation9 + $0x48] sm:$0xff]
    %v399 = vld [vmem:[#allocation9 + $0x50] sm:$0xff]
    %v400 = vld [vmem:[#allocation9 + $0x58] sm:$0xff]
    %v401 = vld [vmem:[#allocation9 + $0x60] sm:$0xff]
    %v402 = vld [vmem:[#allocation9 + $0x68] sm:$0xff]
    %v403 = vld [vmem:[#allocation9 + $0x70] sm:$0xff]
    %v404 = vld [vmem:[#allocation9 + $0x78] sm:$0xff]
    %v405 = vld [vmem:[#allocation10] sm:$0xff]
    %v406 = vld [vmem:[#allocation10 + $0x8] sm:$0xff]
    %v407 = vld [vmem:[#allocation10 + $0x10] sm:$0xff]
    %v408 = vld [vmem:[#allocation10 + $0x18] sm:$0xff]
    %v409 = vld [vmem:[#allocation10 + $0x20] sm:$0xff]
    %v410 = vld [vmem:[#allocation10 + $0x28] sm:$0xff]
    %v411 = vld [vmem:[#allocation10 + $0x30] sm:$0xff]
    %v412 = vld [vmem:[#allocation10 + $0x38] sm:$0xff]
    %v413 = vld [vmem:[#allocation10 + $0x40] sm:$0xff]
    %v414 = vld [vmem:[#allocation10 + $0x48] sm:$0xff]
    %v415 = vld [vmem:[#allocation10 + $0x50] sm:$0xff]
    %v416 = vld [vmem:[#allocation10 + $0x58] sm:$0xff]
    %v417 = vld [vmem:[#allocation10 + $0x60] sm:$0xff]
    %v418 = vld [vmem:[#allocation10 + $0x68] sm:$0xff]
    %v419 = vld [vmem:[#allocation10 + $0x70] sm:$0xff]
    %v420 = vld [vmem:[#allocation10 + $0x78] sm:$0xff]
    %v421 = vld [vmem:[%s12] sm:$0x1]
    %422 = vmatpush.msra.mxu0 %v420
    %423 = vmatpush.msra.mxu0 %v419
    %424 = vmatpush.msra.mxu0 %v418
    %425 = vmatpush.msra.mxu0 %v417
    %426 = vmatpush.msra.mxu0 %v416
    %427 = vmatpush.msra.mxu0 %v415
    %428 = vmatpush.msra.mxu0 %v414
    %429 = vmatpush.msra.mxu0 %v413
    %430 = vmatpush.msra.mxu0 %v412
    %431 = vmatpush.msra.mxu0 %v411
    %432 = vmatpush.msra.mxu0 %v410
    %433 = vmatpush.msra.mxu0 %v409
    %434 = vmatpush.msra.mxu0 %v408
    %435 = vmatpush.msra.mxu0 %v407
    %436 = vmatpush.msra.mxu0 %v406
    %437 = vmatpush.msra.mxu0 %v405
    %438 = vmatmul.f32.gmra.mxu0 %v185
    %v439 = vpop.f32.mrf.mxu0
    %v440 = vadd.f32 0.0, %v439
    %441 = vdwg.mxu0
    %442 = vmatpush.msra.mxu0 %v404
    %443 = vmatpush.msra.mxu0 %v403
    %444 = vmatpush.msra.mxu0 %v402
    %445 = vmatpush.msra.mxu0 %v401
    %446 = vmatpush.msra.mxu0 %v400
    %447 = vmatpush.msra.mxu0 %v399
    %448 = vmatpush.msra.mxu0 %v398
    %449 = vmatpush.msra.mxu0 %v397
    %450 = vmatpush.msra.mxu0 %v396
    %451 = vmatpush.msra.mxu0 %v395
    %452 = vmatpush.msra.mxu0 %v394
    %453 = vmatpush.msra.mxu0 %v393
    %454 = vmatpush.msra.mxu0 %v392
    %455 = vmatpush.msra.mxu0 %v391
    %456 = vmatpush.msra.mxu0 %v390
    %457 = vmatpush.msra.mxu0 %v389
    %458 = vmatmul.f32.gmra.mxu0 %v388
    %v459 = vpop.f32.mrf.mxu0
    %v460 = vadd.f32 %v440, %v459
    %461 = vdwg.mxu0
    %v463 = vperm.slane %v421, 0
    %v465 = vadd.f32 %v460, %v463
    %v466 = vmax.f32 %v465, 0.0
    %v467 = vld [vmem:[#allocation12] sm:$0xff]
    %v468 = vld [vmem:[#allocation12 + $0x8] sm:$0xff]
    %v469 = vld [vmem:[#allocation12 + $0x10] sm:$0xff]
    %v470 = vld [vmem:[#allocation12 + $0x18] sm:$0xff]
    %v471 = vld [vmem:[#allocation12 + $0x20] sm:$0xff]
    %v472 = vld [vmem:[#allocation12 + $0x28] sm:$0xff]
    %v473 = vld [vmem:[#allocation12 + $0x30] sm:$0xff]
    %v474 = vld [vmem:[#allocation12 + $0x38] sm:$0xff]
    %v475 = vld [vmem:[#allocation12 + $0x40] sm:$0xff]
    %v476 = vld [vmem:[#allocation12 + $0x48] sm:$0xff]
    %v477 = vld [vmem:[#allocation12 + $0x50] sm:$0xff]
    %v478 = vld [vmem:[#allocation12 + $0x58] sm:$0xff]
    %v479 = vld [vmem:[#allocation12 + $0x60] sm:$0xff]
    %v480 = vld [vmem:[#allocation12 + $0x68] sm:$0xff]
    %v481 = vld [vmem:[#allocation12 + $0x70] sm:$0xff]
    %v482 = vld [vmem:[#allocation12 + $0x78] sm:$0xff]
    %v483 = vld [vmem:[%s14] sm:$0x1]
    %v485 = vperm.slane %v483, 0
    %487 = vmatpush.msra.mxu0 %v482
    %488 = vmatpush.msra.mxu0 %v481
    %489 = vmatpush.msra.mxu0 %v480
    %490 = vmatpush.msra.mxu0 %v479
    %491 = vmatpush.msra.mxu0 %v478
    %492 = vmatpush.msra.mxu0 %v477
    %493 = vmatpush.msra.mxu0 %v476
    %494 = vmatpush.msra.mxu0 %v475
    %495 = vmatpush.msra.mxu0 %v474
    %496 = vmatpush.msra.mxu0 %v473
    %497 = vmatpush.msra.mxu0 %v472
    %498 = vmatpush.msra.mxu0 %v471
    %499 = vmatpush.msra.mxu0 %v470
    %500 = vmatpush.msra.mxu0 %v469
    %501 = vmatpush.msra.mxu0 %v468
    %502 = vmatpush.msra.mxu0 %v467
    %503 = vmatmul.f32.gmra.mxu0 %v466
    %v504 = vpop.f32.mrf.mxu0
    %v505 = vadd.f32 %v485, %v504
    %506 = vdwg.mxu0
    %v507 = vmax.f32 %v505, 0.0
    %v508 = vld [vmem:[#allocation13] sm:$0xff]
    %v509 = vld [vmem:[#allocation13 + $0x8] sm:$0xff]
    %v510 = vld [vmem:[#allocation13 + $0x10] sm:$0xff]
    %v511 = vld [vmem:[#allocation13 + $0x18] sm:$0xff]
    %v512 = vld [vmem:[#allocation13 + $0x20] sm:$0xff]
    %v513 = vld [vmem:[#allocation13 + $0x28] sm:$0xff]
    %v514 = vld [vmem:[#allocation13 + $0x30] sm:$0xff]
    %v515 = vld [vmem:[#allocation13 + $0x38] sm:$0xff]
    %v516 = vld [vmem:[#allocation13 + $0x40] sm:$0xff]
    %v517 = vld [vmem:[#allocation13 + $0x48] sm:$0xff]
    %v518 = vld [vmem:[#allocation13 + $0x50] sm:$0xff]
    %v519 = vld [vmem:[#allocation13 + $0x58] sm:$0xff]
    %v520 = vld [vmem:[#allocation13 + $0x60] sm:$0xff]
    %v521 = vld [vmem:[#allocation13 + $0x68] sm:$0xff]
    %v522 = vld [vmem:[#allocation13 + $0x70] sm:$0xff]
    %v523 = vld [vmem:[#allocation13 + $0x78] sm:$0xff]
    %v524 = vld [vmem:[%s16] sm:$0x1]
    %v526 = vperm.slane %v524, 0
    %528 = vmatpush.msra.mxu0 %v523
    %529 = vmatpush.msra.mxu0 %v522
    %530 = vmatpush.msra.mxu0 %v521
    %531 = vmatpush.msra.mxu0 %v520
    %532 = vmatpush.msra.mxu0 %v519
    %533 = vmatpush.msra.mxu0 %v518
    %534 = vmatpush.msra.mxu0 %v517
    %535 = vmatpush.msra.mxu0 %v516
    %536 = vmatpush.msra.mxu0 %v515
    %537 = vmatpush.msra.mxu0 %v514
    %538 = vmatpush.msra.mxu0 %v513
    %539 = vmatpush.msra.mxu0 %v512
    %540 = vmatpush.msra.mxu0 %v511
    %541 = vmatpush.msra.mxu0 %v510
    %542 = vmatpush.msra.mxu0 %v509
    %543 = vmatpush.msra.mxu0 %v508
    %544 = vmatmul.f32.gmra.mxu0 %v507
    %v545 = vpop.f32.mrf.mxu0
    %v546 = vadd.f32 %v526, %v545
    %547 = vdwg.mxu0
    %v548 = vxor.u32 %v546, 2147483648
    %v549 = vmul.f32 %v548, 1.442695
    %v550 = vpow.pop %v549
    %v551 = vadd.f32 %v550, 1.0
    %v552 = vrcp.pop %v551
    %v553 = vmul.f32 %v551, %v552
    %v554 = vsub.f32 1.0, %v553
    %v555 = vmul.f32 %v552, %v554
    %v556 = vadd.f32 %v552, %v555
    %vm557 = vweird.f32 %v551
    %vm558 = vweird.f32 %v552
    %vm559 = vmor %vm557, %vm558
    %v560 = vsel %vm559, %v552, %v556
    %v561 = vand.u32 2147483647, %v551
    %vm562 = vcmp.eq.f32.partialorder %v561, 8.507059e+37
    %v563 = vand.u32 %v551, 2147483648
    %v564 = vor.u32 1.1754944e-38, %v563
    %v565 = vsel %vm562, %v564, %v560
    %v566 = vmul.f32 1.0, %v565
    %567 = vst [vmem:[%s17] sm:$0xff] %v566
    %568 = vst [vmem:[%s18] sm:$0xff] %v362
    %569 = vst [vmem:[%s19] sm:$0xff] %v382
    // Predicated region
    $region102: #{cvae_forward.1} parent=1 // pred_check
      _
    $region103: #{cvae_forward.1} parent=1 // pred_check_branch
      %571 = sbr.rel (0) target = $region105
    $region104: #{cvae_forward.1} parent=1 // pred_region
      _
    $region105: #{cvae_forward.1} parent=1 // pred_fallthru
      _
    // Predicated region
    $region106: #{cvae_forward.1} parent=1 // pred_check
      _
    $region107: #{cvae_forward.1} parent=1 // pred_check_branch
      %573 = sbr.rel (0) target = $region109
    $region108: #{cvae_forward.1} parent=1 // pred_region
      _
    $region109: #{cvae_forward.1} parent=1 // pred_fallthru
      _
    // Predicated region
    $region110: #{cvae_forward.1} parent=1 // pred_check
      _
    $region111: #{cvae_forward.1} parent=1 // pred_check_branch
      %575 = sbr.rel (0) target = $region113
    $region112: #{cvae_forward.1} parent=1 // pred_region
      _
    $region113: #{cvae_forward.1} parent=1 // pred_fallthru
      _
    // Predicated region
    $region114: #{cvae_forward.1} parent=1 // pred_check
      _
    $region115: #{cvae_forward.1} parent=1 // pred_check_branch
      %577 = sbr.rel (0) target = $region117
    $region116: #{cvae_forward.1} parent=1 // pred_region
      _
    $region117: #{cvae_forward.1} parent=1 // pred_fallthru
      _
    // Predicated region
    $region118: #{cvae_forward.1} parent=1 // pred_check
      _
    $region119: #{cvae_forward.1} parent=1 // pred_check_branch
      %579 = sbr.rel (0) target = $region121
    $region120: #{cvae_forward.1} parent=1 // pred_region
      _
    $region121: #{cvae_forward.1} parent=1 // pred_fallthru
      _
    // Predicated region
    $region122: #{cvae_forward.1} parent=1 // pred_check
      _
    $region123: #{cvae_forward.1} parent=1 // pred_check_branch
      %581 = sbr.rel (0) target = $region125
    $region124: #{cvae_forward.1} parent=1 // pred_region
      _
    $region125: #{cvae_forward.1} parent=1 // pred_fallthru
      _
    %582 = vsyncpa [#allocation3], 1
    %583 = vsyncpa [#allocation5], 1
    %584 = vsyncpa [#allocation8], 1
    %585 = vsyncpa [#allocation11], 1
    %586 = vsyncpa [#allocation14], 1

</llo_original>
